<compile_context>
chip_gen: v7x
topology: tpu7x:2x2x1
jax: 0.10.0
libtpu: 0.0.40
codegen_flags: <defaults>
</compile_context>

<pallas_src>
import functools

import jax
import jax.numpy as jnp
from jax.experimental import pallas as pl
from jax.experimental.pallas import tpu as pltpu


def _kld_kernel(loc_ref, scale_ref, out_ref, acc_ref, *,
                strategy, batch, block_rows, need_mask):
    """One grid step: reduce a (block_rows, D) tile to a scalar partial sum.

    loc_ref, scale_ref : (block_rows, D) VMEM tiles of z_loc / z_scale
    out_ref            : (1, 1) SMEM scalar output (written on the last step)
    acc_ref            : (1,)   SMEM f32 running sum (scratch)
    """
    i = pl.program_id(0)

    @pl.when(i == 0)
    def _():
        acc_ref[0] = jnp.float32(0.0)

    m = loc_ref[...].astype(jnp.float32)
    s = scale_ref[...].astype(jnp.float32)

    if strategy == "Gaussian":
        term = -0.5 * (1.0 + 2.0 * jnp.log(s) - m * m - s * s)
    elif strategy == "Laplace":
        am = jnp.abs(m)
        term = s * jnp.exp(-am / s) + am - jnp.log(s) - 1.0
    elif strategy == "Cauchy":
        sp1 = s + 1.0
        term = jnp.log((sp1 * sp1 + m * m) / (4.0 * s))
    else:
        raise NotImplementedError(strategy)

    if need_mask:
        # Only emitted when batch is not a multiple of the row tile: zero the
        # padded rows so they do not pollute the reduction.
        rows = i * block_rows + jax.lax.broadcasted_iota(jnp.int32, term.shape, 0)
        term = jnp.where(rows < batch, term, 0.0)

    acc_ref[0] += jnp.sum(term)

    @pl.when(i == pl.num_programs(0) - 1)
    def _():
        out_ref[0, 0] = acc_ref[0] / jnp.float32(batch)


def kld_loss(z_loc, z_scale, strategy="Gaussian", *, block_rows=None):
    """JAX wrapper reproducing KLDLoss(strategy).forward(z_loc, z_scale)."""
    if strategy in ("Logistic", "Hypsecant"):
        raise NotImplementedError(strategy)  # matches the PyTorch module
    if strategy not in ("Gaussian", "Laplace", "Cauchy"):
        raise ValueError(
            "Undefined distribution. Set strategy to Deterministic, Gaussian, "
            "Laplace, Logistic, Cauchy, or Hypsecant.")
    assert z_loc.ndim == 2 and z_loc.shape == z_scale.shape
    B, D = int(z_loc.shape[0]), int(z_loc.shape[1])

    # Row tile: whole batch if small, otherwise a sublane-aligned tile.
    if block_rows is None:
        block_rows = B if B <= 512 else 512
    if block_rows != B:
        block_rows = max(8, (block_rows // 8) * 8)   # (8, 128) sublane rule
    grid = (pl.cdiv(B, block_rows),)
    need_mask = (B % block_rows) != 0

    kernel = functools.partial(
        _kld_kernel,
        strategy=strategy,
        batch=B,
        block_rows=block_rows,
        need_mask=need_mask,
    )

    itemsize = jnp.dtype(z_loc.dtype).itemsize
    # 2 inputs x double-buffer x tile, plus slack; keep an explicit limit so
    # large batches still pick a pipelined tile that fits scoped VMEM.
    vmem_bytes = min(
        max(2 * 2 * block_rows * D * itemsize + (1 << 20), 16 << 20),
        100 << 20,
    )

    out = pl.pallas_call(
        kernel,
        out_shape=jax.ShapeDtypeStruct((1, 1), jnp.float32),
        grid_spec=pltpu.PrefetchScalarGridSpec(
            num_scalar_prefetch=0,
            grid=grid,
            in_specs=[
                pl.BlockSpec((block_rows, D), lambda i: (i, 0)),
                pl.BlockSpec((block_rows, D), lambda i: (i, 0)),
            ],
            out_specs=pl.BlockSpec(
                (1, 1), lambda i: (0, 0),
                memory_space=pltpu.MemorySpace.SMEM),
            scratch_shapes=[pltpu.SMEM((1,), jnp.float32)],
        ),
        compiler_params=pltpu.CompilerParams(
            dimension_semantics=("arbitrary",),   # output accumulates across grid
            vmem_limit_bytes=vmem_bytes,
        ),
    )(z_loc, z_scale)
    return out[0, 0]


def _kld_ref(z_loc, z_scale, strategy):
    """Pure-JAX reference mirroring the PyTorch module, for verification."""
    m = z_loc.astype(jnp.float32)
    s = z_scale.astype(jnp.float32)
    if strategy == "Gaussian":
        kl = -0.5 * jnp.sum(1.0 + 2.0 * jnp.log(s) - m ** 2 - s ** 2, axis=1)
    elif strategy == "Laplace":
        kl = jnp.sum(s * jnp.exp(-jnp.abs(m) / s) + jnp.abs(m) - jnp.log(s) - 1.0,
                     axis=1)
    elif strategy == "Cauchy":
        kl = jnp.log(((s + 1.0) ** 2 + m ** 2) / (4.0 * s))
    else:
        raise NotImplementedError(strategy)
    return jnp.sum(kl) / kl.shape[0]


if __name__ == "__main__":
    key = jax.random.PRNGKey(0)
    k_loc, k_scale = jax.random.split(key)
    # Small shapes consistent with the module: batch=8, hidden=32.
    B, D = 8, 32
    z_loc = jax.random.normal(k_loc, (B, D), dtype=jnp.float32)
    z_scale = jax.random.uniform(k_scale, (B, D), dtype=jnp.float32,
                                 minval=0.5, maxval=1.5)

    for strat in ("Gaussian", "Laplace", "Cauchy"):
        loss = jax.block_until_ready(kld_loss(z_loc, z_scale, strategy=strat))
        ref = jax.block_until_ready(_kld_ref(z_loc, z_scale, strat))
        assert jnp.isfinite(loss), f"{strat}: non-finite loss"
        assert jnp.allclose(loss, ref, rtol=1e-5, atol=1e-5), (strat, loss, ref)

    # TODO(synk): 'Logistic' and 'Hypsecant' raise NotImplementedError in the
    # reference module, so they are intentionally not implemented here.
    print("KERNEL_OK")
</pallas_src>

<mosaic_0001>
module attributes {stable_mosaic.version = 11 : i64} {
  func.func @_kld_kernel(%arg0: i32, %arg1: memref<8x32xf32, #tpu.memory_space<vmem>>, %arg2: memref<8x32xf32, #tpu.memory_space<vmem>>, %arg3: memref<1x1xf32, #tpu.memory_space<smem>>, %arg4: memref<1xf32, #tpu.memory_space<smem>>) attributes {dimension_semantics = [#tpu.dimension_semantics<arbitrary>], iteration_bounds = array<i64: 1>, scalar_prefetch = 0 : i64, scratch_operands = 1 : i64, tpu.core_type = #tpu.core_type<tc>, window_params = [{transform_indices = @transform_0, window_bounds = array<i64: 8, 32>}, {transform_indices = @transform_1, window_bounds = array<i64: 8, 32>}, {transform_indices = @transform_2, window_bounds = array<i64: 1, 1>}]} {
    %c0_i32 = arith.constant 0 : i32
    %0 = arith.cmpi eq, %arg0, %c0_i32 : i32
    %1 = arith.extui %0 : i1 to i32
    %c0_i32_0 = arith.constant 0 : i32
    %2 = arith.cmpi ne, %1, %c0_i32_0 : i32
    scf.if %2 {
      %cst_11 = arith.constant 0.000000e+00 : f32
      %c0_12 = arith.constant 0 : index
      %26 = memref.load %arg4[%c0_12] : memref<1xf32, #tpu.memory_space<smem>>
      memref.store %cst_11, %arg4[%c0_12] : memref<1xf32, #tpu.memory_space<smem>>
    } else {
    }
    %c0 = arith.constant 0 : index
    %c0_1 = arith.constant 0 : index
    %3 = vector.load %arg1[%c0, %c0_1] : memref<8x32xf32, #tpu.memory_space<vmem>>, vector<8x32xf32>
    %c0_2 = arith.constant 0 : index
    %c0_3 = arith.constant 0 : index
    %4 = vector.load %arg2[%c0_2, %c0_3] : memref<8x32xf32, #tpu.memory_space<vmem>>, vector<8x32xf32>
    %5 = math.log %4 : vector<8x32xf32>
    %cst = arith.constant 2.000000e+00 : f32
    %6 = vector.broadcast %cst : f32 to vector<8x32xf32>
    %7 = arith.mulf %6, %5 : vector<8x32xf32>
    %cst_4 = arith.constant 1.000000e+00 : f32
    %8 = vector.broadcast %cst_4 : f32 to vector<8x32xf32>
    %9 = arith.addf %8, %7 : vector<8x32xf32>
    %10 = arith.mulf %3, %3 : vector<8x32xf32>
    %11 = arith.subf %9, %10 : vector<8x32xf32>
    %12 = arith.mulf %4, %4 : vector<8x32xf32>
    %13 = arith.subf %11, %12 : vector<8x32xf32>
    %cst_5 = arith.constant -5.000000e-01 : f32
    %14 = vector.broadcast %cst_5 : f32 to vector<8x32xf32>
    %15 = arith.mulf %14, %13 : vector<8x32xf32>
    %c0_6 = arith.constant 0 : index
    %16 = memref.load %arg4[%c0_6] : memref<1xf32, #tpu.memory_space<smem>>
    %17 = vector.shape_cast %15 : vector<8x32xf32> to vector<1x8x32xf32>
    %cst_7 = arith.constant dense<0.000000e+00> : vector<1xf32>
    %18 = vector.multi_reduction <add>, %17, %cst_7 [1, 2] : vector<1x8x32xf32> to vector<1xf32>
    %19 = vector.shape_cast %18 : vector<1xf32> to vector<1x1x1xf32>
    %20 = vector.extract %19[0, 0, 0] : f32 from vector<1x1x1xf32>
    %21 = arith.addf %16, %20 : f32
    %c0_8 = arith.constant 0 : index
    %22 = memref.load %arg4[%c0_8] : memref<1xf32, #tpu.memory_space<smem>>
    memref.store %21, %arg4[%c0_8] : memref<1xf32, #tpu.memory_space<smem>>
    %c0_i32_9 = arith.constant 0 : i32
    %23 = arith.cmpi eq, %arg0, %c0_i32_9 : i32
    %24 = arith.extui %23 : i1 to i32
    %c0_i32_10 = arith.constant 0 : i32
    %25 = arith.cmpi ne, %24, %c0_i32_10 : i32
    scf.if %25 {
      %c0_11 = arith.constant 0 : index
      %26 = memref.load %arg4[%c0_11] : memref<1xf32, #tpu.memory_space<smem>>
      %cst_12 = arith.constant 8.000000e+00 : f32
      %27 = arith.divf %26, %cst_12 : f32
      %c0_13 = arith.constant 0 : index
      %c0_14 = arith.constant 0 : index
      %28 = memref.load %arg3[%c0_13, %c0_14] : memref<1x1xf32, #tpu.memory_space<smem>>
      memref.store %27, %arg3[%c0_13, %c0_14] : memref<1x1xf32, #tpu.memory_space<smem>>
    } else {
    }
    return
  }
  func.func @transform_0(%arg0: i32) -> (i32, i32) {
    %c0_i32 = arith.constant 0 : i32
    %c0_i32_0 = arith.constant 0 : i32
    return %arg0, %c0_i32 : i32, i32
  }
  func.func @transform_1(%arg0: i32) -> (i32, i32) {
    %c0_i32 = arith.constant 0 : i32
    %c0_i32_0 = arith.constant 0 : i32
    return %arg0, %c0_i32 : i32, i32
  }
  func.func @transform_2(%arg0: i32) -> (i32, i32) {
    %c0_i32 = arith.constant 0 : i32
    %c0_i32_0 = arith.constant 0 : i32
    %c0_i32_1 = arith.constant 0 : i32
    return %c0_i32, %c0_i32_0 : i32, i32
  }
}

</mosaic_0001>

<llo_original>
// kernel: tpu_custom_call.1
$region0: #{tpu_custom_call.1}
  #allocation0 [shape = 'u32[]', space=smem, size = 0x4, offset = 0x4, fixed_abs, tag = 'smem constant byte address 0x4 - core index']
  #allocation1 [shape = 'u32[144,128]{1,0:T(1,128)}', space=vmem, size = 0x12000, scoped, tag = 'internal scratch']
  #allocation2 [shape = 'f32[1]{0:T(128)}', space=smem, size = 0x200, scoped, tag = 'scratch operand']
  %s0 = inlined_call_operand.hbm [shape: f32[8,32], index: 0, kind: input, shape index: {}]
  %s1 = inlined_call_operand.hbm [shape: f32[8,32], index: 1, kind: input, shape index: {}]
  %s2 = inlined_call_operand.hbm [shape: f32[1,1], index: 2, kind: output, shape index: {}]
  %s3 = sld [smem:[#allocation0]]
  $region34: #{tpu_custom_call.1} parent=0
    _
  %s5 = ssub.s32 1, %s3
  %s6 = scalar_select 0, %s5, %s3
  $region1: #{tpu_custom_call.1} parent=0
    #allocation3 [shape = 'u8[4096]{0}', space=vmem, size = 0x1000, scoped, tag = 'input window, operand 0, single buffered']
    #allocation4 [shape = 's32[1]{0}', space=sflag, size = 0x4, scoped, tag = 'scoped memory for tpu_custom_call.1']
    #allocation5 [shape = 's32[1]{0}', space=sflag, size = 0x4, scoped, tag = 'scoped memory for tpu_custom_call.1']
    #allocation6 [shape = 'u8[4096]{0}', space=vmem, size = 0x1000, scoped, tag = 'input window, operand 1, single buffered']
    #allocation7 [shape = 's32[1]{0}', space=sflag, size = 0x4, scoped, tag = 'scoped memory for tpu_custom_call.1']
    #allocation8 [shape = 'u8[512]{0}', space=smem, size = 0x200, scoped, tag = 'output window, operand 0, single buffered']
    %7 = vsyncpa [#allocation4], 0
    %8 = vsyncpa [#allocation7], 0
    %9 = vsyncpa [#allocation5], 0
    // Predicated region
    $region2: #{tpu_custom_call.1} parent=1 // pred_check
      _
    $region3: #{tpu_custom_call.1} parent=1 // pred_check_branch
      %11 = sbr.rel (0) target = $region5
    $region4: #{tpu_custom_call.1} parent=1 // pred_region
      %s13 = ssub.s32 128, 128
      %14 = vsyncadd [#allocation4], %s13
      %s16 = sshll.u32 [#allocation3], 4
      %s17 = int_to_ptr.vmem [resolvable:$true] %s16
      %19 = dma.hbm_to_vmem [thread:$0]  %s0, 128, %s17, [#allocation4]
    $region5: #{tpu_custom_call.1} parent=1 // pred_fallthru
      _
    // Predicated region
    $region6: #{tpu_custom_call.1} parent=1 // pred_check
      _
    $region7: #{tpu_custom_call.1} parent=1 // pred_check_branch
      %21 = sbr.rel (0) target = $region9
    $region8: #{tpu_custom_call.1} parent=1 // pred_region
      %s23 = ssub.s32 128, 128
      %24 = vsyncadd [#allocation7], %s23
      %s26 = sshll.u32 [#allocation6], 4
      %s27 = int_to_ptr.vmem [resolvable:$true] %s26
      %29 = dma.hbm_to_vmem [thread:$0]  %s1, 128, %s27, [#allocation7]
    $region9: #{tpu_custom_call.1} parent=1 // pred_fallthru
      _
    // Predicated region
    $region10: #{tpu_custom_call.1} parent=1 // pred_check
      _
    $region11: #{tpu_custom_call.1} parent=1 // pred_check_branch
      %31 = sbr.rel (0) target = $region13
    $region12: #{tpu_custom_call.1} parent=1 // pred_region
      %32 = dma.done [#allocation4], 128
    $region13: #{tpu_custom_call.1} parent=1 // pred_fallthru
      _
    // Predicated region
    $region14: #{tpu_custom_call.1} parent=1 // pred_check
      _
    $region15: #{tpu_custom_call.1} parent=1 // pred_check_branch
      %34 = sbr.rel (0) target = $region17
    $region16: #{tpu_custom_call.1} parent=1 // pred_region
      %35 = dma.done [#allocation7], 128
    $region17: #{tpu_custom_call.1} parent=1 // pred_fallthru
      _
    %p36 = scmp.eq.s32.totalorder 0, 0
    // Predicated region
    $region18: #{tpu_custom_call.1} parent=1 // pred_check
      %p37 = pneg %p36
    $region19: #{tpu_custom_call.1} parent=1 // pred_check_branch
      %39 = sbr.rel (%p37) target = $region21
    $region20: #{tpu_custom_call.1} parent=1 // pred_region
      %s40 = scalar_lea.smem [#allocation2], 0
      %41 = sst [smem:[%s40]] 0.0
    $region21: #{tpu_custom_call.1} parent=1 // pred_fallthru
      _
    %v42 = vld [vmem:[#allocation3] sm:$0xff]
    %v43 = vld [vmem:[#allocation6] sm:$0xff]
    %v44 = vlog2.pop %v43
    %v45 = vmul.f32 %v44, 0.6931472
    %v46 = vmul.f32 %v45, 2.0
    %v47 = vadd.f32 %v46, 1.0
    %v48 = vmul.f32 %v42, %v42
    %v49 = vsub.f32 %v47, %v48
    %v50 = vmul.f32 %v43, %v43
    %v51 = vsub.f32 %v49, %v50
    %v52 = vmul.f32 %v51, -0.5
    %s53 = sld [smem:[#allocation2]]
    %vm54 = vcmask 261120
    %v55 = vsel %vm54, %v52, 0.0
    %56 = vadd.xlane.f32.xlu0 %v55
    %v57 = vpop.xlane.xlu0 %56
    %v58 = vrot.slane %v57, 4
    %v59 = vadd.f32 %v57, %v58
    %v60 = vrot.slane %v59, 2
    %v61 = vadd.f32 %v59, %v60
    %v62 = vrot.slane %v61, 1
    %v63 = vadd.f32 %v61, %v62
    %s64 = vtos %v63
    %s65 = sadd.f32 %s53, %s64
    %s66 = scalar_lea.smem [#allocation2], 0
    %67 = sst [smem:[%s66]] %s65
    // Predicated region
    $region22: #{tpu_custom_call.1} parent=1 // pred_check
      %p68 = pneg %p36
    $region23: #{tpu_custom_call.1} parent=1 // pred_check_branch
      %70 = sbr.rel (%p68) target = $region25
    $region24: #{tpu_custom_call.1} parent=1 // pred_region
      %s71 = sld [smem:[#allocation2]]
      %v72 = vrcp.pop 8.0
      %s73 = vtos %v72
      %s74 = smul.f32 %s71, %s73
      %s75 = scalar_lea.smem [#allocation8], 0
      %76 = sst [smem:[%s75]] %s74
    $region25: #{tpu_custom_call.1} parent=1 // pred_fallthru
      _
    // Predicated region
    $region26: #{tpu_custom_call.1} parent=1 // pred_check
      _
    $region27: #{tpu_custom_call.1} parent=1 // pred_check_branch
      %78 = sbr.rel (0) target = $region29
    $region28: #{tpu_custom_call.1} parent=1 // pred_region
      %s80 = ssub.s32 16, 16
      %81 = vsyncadd [#allocation5], %s80
      %84 = dma.smem_to_hbm [#allocation8], 16, %s2, [#allocation5]
    $region29: #{tpu_custom_call.1} parent=1 // pred_fallthru
      _
    // Predicated region
    $region30: #{tpu_custom_call.1} parent=1 // pred_check
      _
    $region31: #{tpu_custom_call.1} parent=1 // pred_check_branch
      %86 = sbr.rel (0) target = $region33
    $region32: #{tpu_custom_call.1} parent=1 // pred_region
      %87 = dma.done [#allocation5], 16
    $region33: #{tpu_custom_call.1} parent=1 // pred_fallthru
      _
    %88 = sfence
    %89 = vsyncpa [#allocation4], 1
    %90 = vsyncpa [#allocation7], 1
    %91 = vsyncpa [#allocation5], 1

</llo_original>
